<compile_context>
chip_gen: v6e
topology: v6e:2x2x1
jax: 0.10.0
libtpu: 0.0.40
codegen_flags: <defaults>
</compile_context>

<pallas_src>
from typing import NamedTuple

import jax
import jax.numpy as jnp
from jax import lax
from jax.experimental import pallas as pl
from jax.experimental.pallas import tpu as pltpu


def _round_up(x, m):
    return ((x + m - 1) // m) * m


def _sublane_align(dtype):
    # Sub-32-bit dtypes pack along sublanes; keep tile rows a multiple of the packing.
    return {4: 8, 2: 16, 1: 32}.get(jnp.dtype(dtype).itemsize, 8)


def _vmem_limit_bytes():
    """Generation-aware scoped-VMEM limit: ~3/4 of physical per-core VMEM.

    v7x has only 64 MiB per TensorCore, so never request all of it; v5e/v6e
    have 128 MiB, so ~96 MiB still leaves compiler-internal headroom.
    """
    try:
        cap = getattr(pltpu.get_tpu_info(), "vmem_capacity_bytes", None)
    except Exception:
        cap = None
    if not cap:
        return None
    return int(cap) * 3 // 4


def _compiler_params(dimension_semantics):
    kwargs = dict(dimension_semantics=dimension_semantics)
    limit = _vmem_limit_bytes()
    if limit is not None:
        kwargs["vmem_limit_bytes"] = limit
    return pltpu.CompilerParams(**kwargs)


# ----------------------- Pass 1 (prep-time): inverse column norms -----------------------
def col_inv_norm_kernel(v_ref, o_ref):
    # v_ref: (tn, tk) f32 tile of weight_v.  Grid = (K tiles, N tiles); N (the
    # reduction over out_features) is the last grid axis.  The output block index
    # is invariant along it, so accumulate directly into o_ref (f32) -- no scratch.
    @pl.when(pl.program_id(1) == 0)
    def _():
        o_ref[...] = jnp.zeros_like(o_ref)

    v = v_ref[...]
    o_ref[...] += jnp.sum(v * v, axis=0, keepdims=True)        # (1, tk)

    @pl.when(pl.program_id(1) == pl.num_programs(1) - 1)
    def _():
        # rsqrt goes to the EUP slot; avoids sqrt + full-width divide on the VALU.
        o_ref[...] = lax.rsqrt(o_ref[...])


# ---------------------- Pass 2 (hot path): tiled matmul + epilogue ----------------------
def wn_matmul_kernel(x_ref, wt_ref, inv_ref, gb_ref, o_ref):
    # x_ref:  (tm, tk) compute dtype      wt_ref: (tk, tn) compute dtype (pre-transposed v)
    # inv_ref:(1, tk)  f32                gb_ref: (2, tn)  f32 (row 0 = g, row 1 = bias)
    # o_ref:  (tm, tn) f32 -- doubles as the accumulator (k-invariant output block).
    @pl.when(pl.program_id(2) == 0)
    def _():
        o_ref[...] = jnp.zeros_like(o_ref)

    # Scale x by the inverse column norm in f32 on the VPU (v5e has no bf16 VALU),
    # then cast only the MXU operand back to the compute dtype.
    xs = (x_ref[...].astype(jnp.float32) * inv_ref[...]).astype(wt_ref.dtype)
    o_ref[...] += jnp.dot(xs, wt_ref[...], preferred_element_type=jnp.float32)

    @pl.when(pl.program_id(2) == pl.num_programs(2) - 1)
    def _():
        # Fused epilogue: lane-dense (1, tn) rows broadcast across the output tile.
        o_ref[...] = o_ref[...] * gb_ref[0:1, :] + gb_ref[1:2, :]


def wn_matmul_kernel_cast(x_ref, wt_ref, inv_ref, gb_ref, o_ref, acc_ref):
    # Variant for non-f32 output (e.g. bf16 writeback on bandwidth-bound v6e):
    # keep an f32 accumulator scratch and cast only in the epilogue.
    @pl.when(pl.program_id(2) == 0)
    def _():
        acc_ref[...] = jnp.zeros_like(acc_ref)

    xs = (x_ref[...].astype(jnp.float32) * inv_ref[...]).astype(wt_ref.dtype)
    acc_ref[...] += jnp.dot(xs, wt_ref[...], preferred_element_type=jnp.float32)

    @pl.when(pl.program_id(2) == pl.num_programs(2) - 1)
    def _():
        o_ref[...] = (acc_ref[...] * gb_ref[0:1, :] + gb_ref[1:2, :]).astype(o_ref.dtype)


# --------------------------------- Wrapper / weight prep --------------------------------
class WNParams(NamedTuple):
    wt: jax.Array        # (K_pad, N_pad) compute dtype: pre-transposed, padded weight_v
    inv_norm: jax.Array  # (1, K_pad) f32: 1/||weight_v[:, k]||, zeroed for padded k
    gb: jax.Array        # (2, N_pad) f32: row 0 = weight_g, row 1 = bias
    out_features: int
    in_features: int
    tn: int
    tk: int


def prepare_weight_norm_params(weight_v, weight_g, bias, *,
                               compute_dtype=jnp.bfloat16,
                               tn_max=512, tk_max=1024):
    """Once-per-weight-update prep (cache and reuse across forward calls).

    Everything here depends only on the parameters, not on x: padding, the
    transpose to MXU orientation, the compute-dtype cast, the column-norm pass
    and the [g; bias] packing are hoisted out of the per-forward hot path.
    """
    N, K = weight_v.shape

    tn = min(tn_max, _round_up(N, 128))
    tk = min(tk_max, _round_up(K, 128))
    # v7x megacore: the 2 TensorCores shard the parallel grid axes; if one tn tile
    # swallows all of N (and B fits one tm tile) a core idles.  Split N into >=2
    # blocks whenever it costs no extra padding.
    if tn > 128:
        half = _round_up(tn // 2, 128)
        if _round_up(N, tn) // tn < 2 and _round_up(N, half) == _round_up(N, tn):
            tn = half
    N_pad = _round_up(N, tn)
    K_pad = _round_up(K, tk)

    # Single padded f32 copy of weight_v: feeds the norm pass (full precision) and
    # the pre-transposed compute-dtype MXU copy.  Both happen only at prep time.
    v_pad = jnp.pad(weight_v.astype(jnp.float32), ((0, N_pad - N), (0, K_pad - K)))
    wt = v_pad.T.astype(compute_dtype)                      # (K_pad, N_pad), MXU-ready

    # Pass-1 tiling: K is its only parallel axis; keep >=2 K blocks when it is
    # free so both v7x cores get work (best-effort; prep-time only).
    tk1 = tk
    if K_pad // tk1 < 2 and tk1 % 256 == 0 and K_pad % (tk1 // 2) == 0:
        tk1 //= 2

    inv_norm = pl.pallas_call(
        col_inv_norm_kernel,
        out_shape=jax.ShapeDtypeStruct((1, K_pad), jnp.float32),
        grid_spec=pltpu.PrefetchScalarGridSpec(
            num_scalar_prefetch=0,
            grid=(K_pad // tk1, N_pad // tn),                 # N (reduction) last
            in_specs=[pl.BlockSpec((tn, tk1), lambda k, n: (n, k))],
            out_specs=pl.BlockSpec((1, tk1), lambda k, n: (0, k)),
        ),
        compiler_params=_compiler_params(("parallel", "arbitrary")),
    )(v_pad)

    # Padded K columns are all-zero -> rsqrt(0) = inf; zero their inverse norm so
    # the in-kernel x * inv product stays finite (matching wt rows are zero, so
    # they contribute nothing).  Genuinely zero real columns still give inf/NaN,
    # matching torch.nn.utils.weight_norm behavior.
    if K_pad > K:
        inv_norm = jnp.where(jnp.arange(K_pad)[None, :] < K, inv_norm, 0.0)

    gb = jnp.pad(
        jnp.concatenate([weight_g.reshape(1, N), bias.reshape(1, N)], axis=0)
        .astype(jnp.float32),
        ((0, 0), (0, N_pad - N)))

    return WNParams(wt=wt, inv_norm=inv_norm, gb=gb,
                    out_features=N, in_features=K, tn=tn, tk=tk)


def weight_normalized_linear_forward(x, params, *, tm_max=512, out_dtype=jnp.float32):
    """Hot path: out = x @ (g * v / ||v||_col).T + bias.T, streaming x in compute dtype."""
    B, K = x.shape
    assert K == params.in_features, "in_features mismatch"
    K_pad, N_pad = params.wt.shape
    tn, tk = params.tn, params.tk
    compute_dtype = params.wt.dtype

    tm = min(tm_max, _round_up(B, _sublane_align(compute_dtype)))
    B_pad = _round_up(B, tm)

    # Only per-call data movement of x: fused cast to compute dtype + pad.
    x_p = jnp.pad(x.astype(compute_dtype), ((0, B_pad - B), (0, K_pad - K)))

    cd = jnp.dtype(compute_dtype).itemsize
    od = jnp.dtype(out_dtype).itemsize
    cost = pl.CostEstimate(
        flops=2 * B_pad * N_pad * K_pad,
        transcendentals=0,
        bytes_accessed=(B_pad * K_pad * cd + K_pad * N_pad * cd
                        + K_pad * 4 + 2 * N_pad * 4 + B_pad * N_pad * od),
    )

    if jnp.dtype(out_dtype) == jnp.dtype(jnp.float32):
        kernel, scratch = wn_matmul_kernel, []                 # accumulate in o_ref
    else:
        kernel, scratch = wn_matmul_kernel_cast, [pltpu.VMEM((tm, tn), jnp.float32)]

    out_pad = pl.pallas_call(
        kernel,
        out_shape=jax.ShapeDtypeStruct((B_pad, N_pad), out_dtype),
        grid_spec=pltpu.PrefetchScalarGridSpec(
            num_scalar_prefetch=0,
            grid=(B_pad // tm, N_pad // tn, K_pad // tk),      # K (reduction) last
            in_specs=[
                pl.BlockSpec((tm, tk), lambda i, j, k: (i, k)),   # x (compute dtype)
                pl.BlockSpec((tk, tn), lambda i, j, k: (k, j)),   # weight_v.T (compute dtype)
                pl.BlockSpec((1, tk), lambda i, j, k: (0, k)),    # inverse column norms (f32)
                pl.BlockSpec((2, tn), lambda i, j, k: (0, j)),    # [g; bias] rows (f32)
            ],
            out_specs=pl.BlockSpec((tm, tn), lambda i, j, k: (i, j)),
            scratch_shapes=scratch,
        ),
        compiler_params=_compiler_params(("parallel", "parallel", "arbitrary")),
        cost_estimate=cost,
    )(x_p, params.wt, params.inv_norm, params.gb)

    return out_pad[:B, :params.out_features]


def weight_normalized_linear(x, weight_v, weight_g, bias, *,
                             compute_dtype=jnp.bfloat16, out_dtype=jnp.float32,
                             tm_max=512, tn_max=512, tk_max=1024):
    """Convenience one-shot wrapper.  For repeated forwards with the same weights,
    call prepare_weight_norm_params() once and reuse its result (that is where the
    norm pass and all weight copies live)."""
    params = prepare_weight_norm_params(weight_v, weight_g, bias,
                                        compute_dtype=compute_dtype,
                                        tn_max=tn_max, tk_max=tk_max)
    return weight_normalized_linear_forward(x, params, tm_max=tm_max, out_dtype=out_dtype)


# ------------------------------------- Test harness -------------------------------------
def orthogonal_init(key, shape):
    """Deterministic orthogonal init, like torch.nn.init.orthogonal."""
    rows, cols = shape
    n = max(rows, cols)
    a = jax.random.normal(key, (n, n), dtype=jnp.float32)
    q, r = jnp.linalg.qr(a)
    q = q * jnp.sign(jnp.diagonal(r))
    return q[:rows, :cols].astype(jnp.float32)


def reference(x, weight_v, weight_g, bias):
    """Faithful (full f32) re-implementation of the torch forward."""
    col_norm = jnp.sqrt(jnp.sum(weight_v * weight_v, axis=0, keepdims=True))
    w = weight_g * (weight_v / col_norm)
    return (jnp.matmul(w, x.T, precision=lax.Precision.HIGHEST) + bias).T


if __name__ == "__main__":
    key = jax.random.PRNGKey(0)
    k_x, k_w = jax.random.split(key)

    batch = 8
    in_features = 64
    out_features = 32

    # Deterministic parameters matching the module's __init__ semantics.
    weight_v = orthogonal_init(k_w, (out_features, in_features))     # orthogonal
    weight_g = jnp.ones((out_features, 1), dtype=jnp.float32)        # constant 1.0
    bias = jnp.zeros((out_features, 1), dtype=jnp.float32)           # constant 0.0

    x = jax.random.normal(k_x, (batch, in_features), dtype=jnp.float32)

    ref = reference(x, weight_v, weight_g, bias)

    # f32 MXU operands: tight agreement with the exact reference.
    out_f32 = jax.block_until_ready(
        weight_normalized_linear(x, weight_v, weight_g, bias, compute_dtype=jnp.float32))
    assert out_f32.shape == (batch, out_features)
    assert jnp.allclose(out_f32, ref, atol=1e-4, rtol=1e-4), "f32 mismatch vs reference"

    # bf16 fast path with cached weight prep (the intended production usage).
    params = prepare_weight_norm_params(weight_v, weight_g, bias)    # cache per weight update
    out_bf16 = jax.block_until_ready(weight_normalized_linear_forward(x, params))
    assert out_bf16.shape == (batch, out_features)
    assert jnp.allclose(out_bf16, ref, atol=3e-2, rtol=3e-2), "bf16 mismatch vs reference"

    # bf16 output variant (byte-reduction option for bandwidth-bound v6e).
    out_bf16_out = jax.block_until_ready(
        weight_normalized_linear_forward(x, params, out_dtype=jnp.bfloat16))
    assert out_bf16_out.dtype == jnp.bfloat16
    assert jnp.allclose(out_bf16_out.astype(jnp.float32), ref, atol=5e-2, rtol=5e-2), \
        "bf16-out mismatch vs reference"

    print("KERNEL_OK")
</pallas_src>

<mosaic_0001>
module attributes {stable_mosaic.version = 11 : i64} {
  func.func @col_inv_norm_kernel(%arg0: i32, %arg1: i32, %arg2: memref<128x128xf32, #tpu.memory_space<vmem>>, %arg3: memref<1x128xf32, #tpu.memory_space<vmem>>) attributes {dimension_semantics = [#tpu.dimension_semantics<parallel>, #tpu.dimension_semantics<arbitrary>], iteration_bounds = array<i64: 1, 1>, scalar_prefetch = 0 : i64, scratch_operands = 0 : i64, tpu.core_type = #tpu.core_type<tc>, window_params = [{transform_indices = @transform_0, window_bounds = array<i64: 128, 128>}, {transform_indices = @transform_1, window_bounds = array<i64: 1, 128>}]} {
    %c0_i32 = arith.constant 0 : i32
    %0 = arith.cmpi eq, %arg1, %c0_i32 : i32
    %1 = arith.extui %0 : i1 to i32
    %c0_i32_0 = arith.constant 0 : i32
    %2 = arith.cmpi ne, %1, %c0_i32_0 : i32
    scf.if %2 {
      %cst_8 = arith.constant 0.000000e+00 : f32
      %13 = vector.broadcast %cst_8 : f32 to vector<1x128xf32>
      %c0_9 = arith.constant 0 : index
      %c0_10 = arith.constant 0 : index
      %14 = vector.load %arg3[%c0_9, %c0_10] : memref<1x128xf32, #tpu.memory_space<vmem>>, vector<1x128xf32>
      tpu.vector_store %arg3[%c0_9, %c0_10], %13 {strides = array<i32>} : memref<1x128xf32, #tpu.memory_space<vmem>>, vector<1x128xf32>,
    } else {
    }
    %c0 = arith.constant 0 : index
    %c0_1 = arith.constant 0 : index
    %3 = vector.load %arg2[%c0, %c0_1] : memref<128x128xf32, #tpu.memory_space<vmem>>, vector<128x128xf32>
    %c0_2 = arith.constant 0 : index
    %c0_3 = arith.constant 0 : index
    %4 = vector.load %arg3[%c0_2, %c0_3] : memref<1x128xf32, #tpu.memory_space<vmem>>, vector<1x128xf32>
    %5 = arith.mulf %3, %3 : vector<128x128xf32>
    %cst = arith.constant dense<0.000000e+00> : vector<128xf32>
    %6 = vector.multi_reduction <add>, %5, %cst [0] : vector<128x128xf32> to vector<128xf32>
    %7 = vector.shape_cast %6 : vector<128xf32> to vector<1x128xf32>
    %8 = arith.addf %4, %7 : vector<1x128xf32>
    %c0_4 = arith.constant 0 : index
    %c0_5 = arith.constant 0 : index
    %9 = vector.load %arg3[%c0_4, %c0_5] : memref<1x128xf32, #tpu.memory_space<vmem>>, vector<1x128xf32>
    tpu.vector_store %arg3[%c0_4, %c0_5], %8 {strides = array<i32>} : memref<1x128xf32, #tpu.memory_space<vmem>>, vector<1x128xf32>,
    %c0_i32_6 = arith.constant 0 : i32
    %10 = arith.cmpi eq, %arg1, %c0_i32_6 : i32
    %11 = arith.extui %10 : i1 to i32
    %c0_i32_7 = arith.constant 0 : i32
    %12 = arith.cmpi ne, %11, %c0_i32_7 : i32
    scf.if %12 {
      %c0_8 = arith.constant 0 : index
      %c0_9 = arith.constant 0 : index
      %13 = vector.load %arg3[%c0_8, %c0_9] : memref<1x128xf32, #tpu.memory_space<vmem>>, vector<1x128xf32>
      %14 = math.rsqrt %13 : vector<1x128xf32>
      %c0_10 = arith.constant 0 : index
      %c0_11 = arith.constant 0 : index
      %15 = vector.load %arg3[%c0_10, %c0_11] : memref<1x128xf32, #tpu.memory_space<vmem>>, vector<1x128xf32>
      tpu.vector_store %arg3[%c0_10, %c0_11], %14 {strides = array<i32>} : memref<1x128xf32, #tpu.memory_space<vmem>>, vector<1x128xf32>,
    } else {
    }
    return
  }
  func.func @transform_0(%arg0: i32, %arg1: i32) -> (i32, i32) {
    %c0_i32 = arith.constant 0 : i32
    return %arg1, %arg0 : i32, i32
  }
  func.func @transform_1(%arg0: i32, %arg1: i32) -> (i32, i32) {
    %c0_i32 = arith.constant 0 : i32
    %c0_i32_0 = arith.constant 0 : i32
    return %c0_i32, %arg0 : i32, i32
  }
}

</mosaic_0001>

<llo_original>
// kernel: tpu_custom_call.1
$region0: #{tpu_custom_call.1}
  #allocation0 [shape = 'u32[]', space=smem, size = 0x4, offset = 0x4, fixed_abs, tag = 'smem constant byte address 0x4 - core index']
  #allocation1 [shape = 'u32[144,128]{1,0:T(1,128)}', space=vmem, size = 0x12000, scoped, tag = 'internal scratch']
  %s0 = inlined_call_operand.hbm [shape: f32[128,128], index: 0, kind: input, shape index: {}]
  %s1 = inlined_call_operand.hbm [shape: f32[1,128], index: 1, kind: output, shape index: {}]
  %s2 = sld [smem:[#allocation0]]
  $region26: #{tpu_custom_call.1} parent=0
    _
  %s4 = ssub.s32 1, %s2
  %s5 = scalar_select 0, %s4, %s2
  $region1: #{tpu_custom_call.1} parent=0
    #allocation2 [shape = 'u8[65536]{0}', space=vmem, size = 0x10000, scoped, tag = 'input window, operand 0, single buffered']
    #allocation3 [shape = 's32[1]{0}', space=sflag, size = 0x4, scoped, tag = 'scoped memory for tpu_custom_call.1']
    #allocation4 [shape = 's32[1]{0}', space=sflag, size = 0x4, scoped, tag = 'scoped memory for tpu_custom_call.1']
    #allocation5 [shape = 'u8[512]{0}', space=vmem, size = 0x400, scoped, tag = 'output window, operand 0, single buffered']
    %6 = vsyncpa [#allocation3], 0
    %7 = vsyncpa [#allocation4], 0
    // Predicated region
    $region2: #{tpu_custom_call.1} parent=1 // pred_check
      _
    $region3: #{tpu_custom_call.1} parent=1 // pred_check_branch
      %9 = sbr.rel (0) target = $region5
    $region4: #{tpu_custom_call.1} parent=1 // pred_region
      %s11 = ssub.s32 2048, 2048
      %12 = vsyncadd [#allocation3], %s11
      %s13 = sshll.u32 [#allocation2], 4
      %s14 = int_to_ptr.vmem [resolvable:$true] %s13
      %19 = dma.hbm_to_vmem [thread:$0]  %s0, 2048, %s14, [#allocation3], 128, 128, 8
    $region5: #{tpu_custom_call.1} parent=1 // pred_fallthru
      _
    // Predicated region
    $region6: #{tpu_custom_call.1} parent=1 // pred_check
      _
    $region7: #{tpu_custom_call.1} parent=1 // pred_check_branch
      %21 = sbr.rel (0) target = $region9
    $region8: #{tpu_custom_call.1} parent=1 // pred_region
      %22 = dma.done [#allocation3], 2048
    $region9: #{tpu_custom_call.1} parent=1 // pred_fallthru
      _
    %p23 = scmp.eq.s32.totalorder 0, 0
    // Predicated region
    $region10: #{tpu_custom_call.1} parent=1 // pred_check
      %p24 = pneg %p23
    $region11: #{tpu_custom_call.1} parent=1 // pred_check_branch
      %26 = sbr.rel (%p24) target = $region13
    $region12: #{tpu_custom_call.1} parent=1 // pred_region
      %27 = vst [vmem:[#allocation5] sm:$0x1] 0.0
    $region13: #{tpu_custom_call.1} parent=1 // pred_fallthru
      _
    %v28 = vld [vmem:[#allocation2] sm:$0xff]
    %v29 = vld [vmem:[#allocation2 + $0x8] sm:$0xff]
    %v30 = vld [vmem:[#allocation2 + $0x10] sm:$0xff]
    %v31 = vld [vmem:[#allocation2 + $0x18] sm:$0xff]
    %v32 = vld [vmem:[#allocation2 + $0x20] sm:$0xff]
    %v33 = vld [vmem:[#allocation2 + $0x28] sm:$0xff]
    %v34 = vld [vmem:[#allocation2 + $0x30] sm:$0xff]
    %v35 = vld [vmem:[#allocation2 + $0x38] sm:$0xff]
    %v36 = vld [vmem:[#allocation2 + $0x40] sm:$0xff]
    %v37 = vld [vmem:[#allocation2 + $0x48] sm:$0xff]
    %v38 = vld [vmem:[#allocation2 + $0x50] sm:$0xff]
    %v39 = vld [vmem:[#allocation2 + $0x58] sm:$0xff]
    %v40 = vld [vmem:[#allocation2 + $0x60] sm:$0xff]
    %v41 = vld [vmem:[#allocation2 + $0x68] sm:$0xff]
    %v42 = vld [vmem:[#allocation2 + $0x70] sm:$0xff]
    %v43 = vld [vmem:[#allocation2 + $0x78] sm:$0xff]
    %v44 = vld [vmem:[#allocation5] sm:$0x1]
    %v45 = vmul.f32 %v28, %v28
    %v46 = vmul.f32 %v29, %v29
    %v47 = vmul.f32 %v30, %v30
    %v48 = vmul.f32 %v31, %v31
    %v49 = vmul.f32 %v32, %v32
    %v50 = vmul.f32 %v33, %v33
    %v51 = vmul.f32 %v34, %v34
    %v52 = vmul.f32 %v35, %v35
    %v53 = vmul.f32 %v36, %v36
    %v54 = vmul.f32 %v37, %v37
    %v55 = vmul.f32 %v38, %v38
    %v56 = vmul.f32 %v39, %v39
    %v57 = vmul.f32 %v40, %v40
    %v58 = vmul.f32 %v41, %v41
    %v59 = vmul.f32 %v42, %v42
    %v60 = vmul.f32 %v43, %v43
    %v61 = vadd.f32 %v45, %v46
    %v62 = vadd.f32 %v61, %v47
    %v63 = vadd.f32 %v62, %v48
    %v64 = vadd.f32 %v63, %v49
    %v65 = vadd.f32 %v64, %v50
    %v66 = vadd.f32 %v65, %v51
    %v67 = vadd.f32 %v66, %v52
    %v68 = vadd.f32 %v67, %v53
    %v69 = vadd.f32 %v68, %v54
    %v70 = vadd.f32 %v69, %v55
    %v71 = vadd.f32 %v70, %v56
    %v72 = vadd.f32 %v71, %v57
    %v73 = vadd.f32 %v72, %v58
    %v74 = vadd.f32 %v73, %v59
    %v75 = vadd.f32 %v74, %v60
    %v76 = vrot.slane %v75, 4
    %v77 = vadd.f32 %v75, %v76
    %v78 = vrot.slane %v77, 2
    %v79 = vadd.f32 %v77, %v78
    %v80 = vrot.slane %v79, 1
    %v81 = vadd.f32 %v79, %v80
    %v82 = vadd.f32 %v44, %v81
    %83 = vst [vmem:[#allocation5] sm:$0x1] %v82
    // Predicated region
    $region14: #{tpu_custom_call.1} parent=1 // pred_check
      %p84 = pneg %p23
    $region15: #{tpu_custom_call.1} parent=1 // pred_check_branch
      %86 = sbr.rel (%p84) target = $region17
    $region16: #{tpu_custom_call.1} parent=1 // pred_region
      %v87 = vld [vmem:[#allocation5] sm:$0x1]
      %v88 = vrsqrt.pop %v87
      %89 = vst [vmem:[#allocation5] sm:$0x1] %v88
    $region17: #{tpu_custom_call.1} parent=1 // pred_fallthru
      _
    // Predicated region
    $region18: #{tpu_custom_call.1} parent=1 // pred_check
      _
    $region19: #{tpu_custom_call.1} parent=1 // pred_check_branch
      %91 = sbr.rel (0) target = $region21
    $region20: #{tpu_custom_call.1} parent=1 // pred_region
      %s93 = ssub.s32 16, 16
      %94 = vsyncadd [#allocation4], %s93
      %s96 = sshll.u32 [#allocation5], 4
      %s97 = int_to_ptr.vmem [resolvable:$true] %s96
      %99 = dma.vmem_to_hbm [thread:$0]  %s97, 16, %s1, [#allocation4]
    $region21: #{tpu_custom_call.1} parent=1 // pred_fallthru
      _
    // Predicated region
    $region22: #{tpu_custom_call.1} parent=1 // pred_check
      _
    $region23: #{tpu_custom_call.1} parent=1 // pred_check_branch
      %101 = sbr.rel (0) target = $region25
    $region24: #{tpu_custom_call.1} parent=1 // pred_region
      %102 = dma.done [#allocation4], 16
    $region25: #{tpu_custom_call.1} parent=1 // pred_fallthru
      _
    %103 = vsyncpa [#allocation3], 1
    %104 = vsyncpa [#allocation4], 1

</llo_original>
